<compile_context>
chip_gen: v7x
topology: tpu7x:2x2x1
jax: 0.10.0
libtpu: 0.0.40
codegen_flags: <defaults>
</compile_context>

<pallas_src>
import functools

import jax
import jax.numpy as jnp
from jax.experimental import pallas as pl
from jax.experimental.pallas import tpu as pltpu


def _round_up(v, m):
    return (v + m - 1) // m * m


def _club_kernel(x_ref, y_ref, s1_ref, s2_ref,
                 w1_ref, b1_ref, w2_ref, b2_ref,
                 out_ref, acc_ref, *, n_valid, y_dim, tile_m, tiles_per_part):
    c = pl.program_id(0)                 # part (megacore-parallel)
    t = pl.program_id(1)                 # row-tile within part (reduction)
    blk = c * tiles_per_part + t         # global row-tile index

    @pl.when(t == 0)
    def _():
        acc_ref[...] = jnp.zeros_like(acc_ref)

    x = x_ref[...]                       # [tile_m, x_dim]
    y = y_ref[...]                       # [tile_m, y_dim]

    # ---- fused first layer (mu-head | logvar-head): one wide MXU pass ------
    h = jnp.dot(x, w1_ref[...], preferred_element_type=jnp.float32) + b1_ref[...]
    h = jnp.maximum(h, 0.0)              # [tile_m, 2*h2]

    # ---- fused (block-diagonal) second layer: [tile_m, 2*y_dim] ------------
    z = jnp.dot(h, w2_ref[...], preferred_element_type=jnp.float32) + b2_ref[...]
    mu = z[:, :y_dim]
    logvar = jnp.tanh(z[:, y_dim:])
    inv_var = jnp.exp(-logvar)           # 1 / exp(logvar)

    nf = jnp.float32(n_valid)
    inv_nm1 = jnp.float32(1.0 / (n_valid - 1))
    d2 = (mu - y) ** 2
    # sum over all j of (y[j]-mu[i])^2, collapsed with the hoisted y-statistics
    sum_all = s2_ref[...] - 2.0 * mu * s1_ref[...] + nf * mu * mu
    sum_off = sum_all - d2               # drop the j == i term
    # per-sample loss:  sum(positive) - sum(negative)
    #                =  sum( inv_var * (sum_off/(N-1) - (mu-y)^2) )
    contrib = inv_var * (sum_off * inv_nm1 - d2)

    # mask zero-padded rows of the final tiles (cheap [tile_m,1] sublane mask)
    row = blk * tile_m + jax.lax.broadcasted_iota(jnp.int32, (tile_m, 1), 0)
    contrib = jnp.where(row < n_valid, contrib, 0.0)

    acc_ref[...] += jnp.sum(contrib)

    @pl.when(t == tiles_per_part - 1)
    def _():
        # lane-dense (8,128) partial-sum tile; wrapper reads element [0, 0].
        out_ref[...] = jnp.broadcast_to(acc_ref[...], out_ref.shape)


def club_pengyi_forward(x, y, params, *, tile_m=512):
    """params: dict w1m,b1m,w2m,b2m,w1v,b1v,w2v,b2v (weights [in,out], biases [1,out])."""
    n, x_dim = x.shape
    _, y_dim = y.shape
    if n < 2:
        raise ValueError("CLUBpengyi.forward divides by (N-1); need at least 2 samples.")
    h2 = params["w1m"].shape[1]

    # ---- wrapper-side prep (hoisted out of the kernel) ----------------------
    # fused layer-1 weight/bias: [x_dim, 2*h2], [1, 2*h2]
    w1_cat = jnp.concatenate([params["w1m"], params["w1v"]], axis=1)
    b1_cat = jnp.concatenate([params["b1m"], params["b1v"]], axis=1)
    # block-diagonal layer-2 weight: [2*h2, 2*y_dim]; fused bias [1, 2*y_dim]
    zeros = jnp.zeros((h2, y_dim), jnp.float32)
    w2_bd = jnp.concatenate(
        [jnp.concatenate([params["w2m"], zeros], axis=1),
         jnp.concatenate([zeros, params["w2v"]], axis=1)], axis=0)
    b2_cat = jnp.concatenate([params["b2m"], params["b2v"]], axis=1)

    # global y statistics (enable tiling of the N axis)
    s1 = jnp.sum(y, axis=0, keepdims=True)        # [1, y_dim]
    s2 = jnp.sum(y * y, axis=0, keepdims=True)    # [1, y_dim]

    # row tile: multiple of 8 sublanes; 512 rows of tiny feature dims is far
    # below the scoped-VMEM limit even with double buffering.
    tm = _round_up(min(tile_m, n), 8)
    # split the row stream across 2 parts for megacore (v7x) when there is
    # more than one tile of work; single-core chips just run the parts serially.
    n_split = 2 if n > tm else 1
    n_pad = _round_up(n, n_split * tm)
    if n_pad != n:
        x = jnp.pad(x, ((0, n_pad - n), (0, 0)))
        y = jnp.pad(y, ((0, n_pad - n), (0, 0)))
    tiles_per_part = n_pad // (n_split * tm)
    grid = (n_split, tiles_per_part)

    kernel = functools.partial(_club_kernel, n_valid=n, y_dim=y_dim,
                               tile_m=tm, tiles_per_part=tiles_per_part)

    def row_spec(d):
        return pl.BlockSpec((tm, d), lambda c, t: (c * tiles_per_part + t, 0))

    def resident_spec(shape):
        return pl.BlockSpec(shape, lambda c, t: (0, 0))

    flops = 2 * n_pad * (x_dim * 2 * h2 + (2 * h2) * (2 * y_dim)) + 12 * n_pad * y_dim
    transcendentals = 2 * n_pad * y_dim
    bytes_accessed = 4 * (n_pad * (x_dim + y_dim)
                          + x_dim * 2 * h2 + 4 * h2 * y_dim
                          + 2 * h2 + 2 * y_dim + 2 * y_dim + 8 * 128 * n_split)

    out = pl.pallas_call(
        kernel,
        out_shape=jax.ShapeDtypeStruct((8, n_split * 128), jnp.float32),
        grid_spec=pltpu.PrefetchScalarGridSpec(
            num_scalar_prefetch=0,
            grid=grid,
            in_specs=[
                row_spec(x_dim),                    # x row tile
                row_spec(y_dim),                    # y row tile
                resident_spec((1, y_dim)),          # s1 = sum_j y
                resident_spec((1, y_dim)),          # s2 = sum_j y^2
                resident_spec((x_dim, 2 * h2)),     # fused layer-1 weight
                resident_spec((1, 2 * h2)),         # fused layer-1 bias
                resident_spec((2 * h2, 2 * y_dim)), # block-diag layer-2 weight
                resident_spec((1, 2 * y_dim)),      # fused layer-2 bias
            ],
            out_specs=pl.BlockSpec((8, 128), lambda c, t: (0, c)),
            scratch_shapes=[pltpu.VMEM((1, 1), jnp.float32)],
        ),
        compiler_params=pltpu.CompilerParams(
            dimension_semantics=("parallel", "arbitrary")),
        cost_estimate=pl.CostEstimate(
            flops=flops,
            transcendentals=transcendentals,
            bytes_accessed=bytes_accessed),
    )(x, y, s1, s2, w1_cat, b1_cat, w2_bd, b2_cat)

    # combine per-part partial sums and take the mean over the N samples
    partials = out[0, ::128]                        # [n_split]
    return jnp.sum(partials) / jnp.float32(n)


def init_params(key, x_dim, y_dim, hidden_size):
    """Deterministic init mimicking nn.Linear's uniform(-1/sqrt(fan_in), +...)."""
    h2 = hidden_size // 2
    keys = jax.random.split(key, 8)

    def lin(kw, kb, fan_in, fan_out):
        bound = 1.0 / jnp.sqrt(jnp.float32(fan_in))
        w = jax.random.uniform(kw, (fan_in, fan_out), jnp.float32, -bound, bound)
        b = jax.random.uniform(kb, (1, fan_out), jnp.float32, -bound, bound)
        return w, b

    w1m, b1m = lin(keys[0], keys[1], x_dim, h2)
    w2m, b2m = lin(keys[2], keys[3], h2, y_dim)
    w1v, b1v = lin(keys[4], keys[5], x_dim, h2)
    w2v, b2v = lin(keys[6], keys[7], h2, y_dim)
    return dict(w1m=w1m, b1m=b1m, w2m=w2m, b2m=b2m,
                w1v=w1v, b1v=b1v, w2v=w2v, b2v=b2v)


def _reference_forward(x, y, p):
    """Pure-JAX replica of the PyTorch CLUBpengyi.forward (O(N^2) form)."""
    h = jnp.maximum(x @ p["w1m"] + p["b1m"], 0.0)
    mu = h @ p["w2m"] + p["b2m"]
    h = jnp.maximum(x @ p["w1v"] + p["b1v"], 0.0)
    logvar = jnp.tanh(h @ p["w2v"] + p["b2v"])
    positive = -(mu - y) ** 2 / jnp.exp(logvar)
    pred1 = mu[:, None, :]
    y1 = y[None, :, :]
    n = mu.shape[0]
    unmask = (1.0 - jnp.eye(n))[:, :, None]
    negative = -(((y1 - pred1) ** 2) * unmask).sum(axis=1) / (n - 1) / jnp.exp(logvar)
    return (positive.sum(axis=-1) - negative.sum(axis=-1)).mean()


if __name__ == "__main__":
    x_dim, y_dim, hidden_size = 32, 16, 32
    key = jax.random.PRNGKey(0)
    kp, kx1, ky1, kx2, ky2 = jax.random.split(key, 5)
    params = init_params(kp, x_dim, y_dim, hidden_size)

    # case 1: small batch, single tile / single part (with row masking)
    x1 = jax.random.normal(kx1, (8, x_dim), jnp.float32)
    y1 = jax.random.normal(ky1, (8, y_dim), jnp.float32)
    out1 = jax.block_until_ready(club_pengyi_forward(x1, y1, params))
    ref1 = _reference_forward(x1, y1, params)
    assert jnp.allclose(out1, ref1, rtol=1e-4, atol=1e-4), (out1, ref1)

    # case 2: multi-tile, 2-part grid (row padding in the last tile)
    x2 = jax.random.normal(kx2, (300, x_dim), jnp.float32)
    y2 = jax.random.normal(ky2, (300, y_dim), jnp.float32)
    out2 = jax.block_until_ready(club_pengyi_forward(x2, y2, params, tile_m=128))
    ref2 = _reference_forward(x2, y2, params)
    assert jnp.allclose(out2, ref2, rtol=1e-4, atol=1e-4), (out2, ref2)

    print("KERNEL_OK")
</pallas_src>

<mosaic_0001>
module attributes {stable_mosaic.version = 11 : i64} {
  func.func @_club_kernel(%arg0: i32, %arg1: i32, %arg2: memref<8x32xf32, #tpu.memory_space<vmem>>, %arg3: memref<8x16xf32, #tpu.memory_space<vmem>>, %arg4: memref<1x16xf32, #tpu.memory_space<vmem>>, %arg5: memref<1x16xf32, #tpu.memory_space<vmem>>, %arg6: memref<32x32xf32, #tpu.memory_space<vmem>>, %arg7: memref<1x32xf32, #tpu.memory_space<vmem>>, %arg8: memref<32x32xf32, #tpu.memory_space<vmem>>, %arg9: memref<1x32xf32, #tpu.memory_space<vmem>>, %arg10: memref<8x128xf32, #tpu.memory_space<vmem>>, %arg11: memref<1x1xf32, #tpu.memory_space<vmem>>) attributes {dimension_semantics = [#tpu.dimension_semantics<parallel>, #tpu.dimension_semantics<arbitrary>], iteration_bounds = array<i64: 1, 1>, scalar_prefetch = 0 : i64, scratch_operands = 1 : i64, tpu.core_type = #tpu.core_type<tc>, window_params = [{transform_indices = @transform_0, window_bounds = array<i64: 8, 32>}, {transform_indices = @transform_1, window_bounds = array<i64: 8, 16>}, {pipeline_mode = #tpu.pipeline_mode<synchronous>, transform_indices = @transform_2, window_bounds = array<i64: 1, 16>}, {pipeline_mode = #tpu.pipeline_mode<synchronous>, transform_indices = @transform_3, window_bounds = array<i64: 1, 16>}, {pipeline_mode = #tpu.pipeline_mode<synchronous>, transform_indices = @transform_4, window_bounds = array<i64: 32, 32>}, {pipeline_mode = #tpu.pipeline_mode<synchronous>, transform_indices = @transform_5, window_bounds = array<i64: 1, 32>}, {pipeline_mode = #tpu.pipeline_mode<synchronous>, transform_indices = @transform_6, window_bounds = array<i64: 32, 32>}, {pipeline_mode = #tpu.pipeline_mode<synchronous>, transform_indices = @transform_7, window_bounds = array<i64: 1, 32>}, {transform_indices = @transform_8, window_bounds = array<i64: 8, 128>}]} {
    %c1_i32 = arith.constant 1 : i32
    %0 = arith.muli %arg0, %c1_i32 : i32
    %1 = arith.addi %0, %arg1 : i32
    %c0_i32 = arith.constant 0 : i32
    %2 = arith.cmpi eq, %arg1, %c0_i32 : i32
    %3 = arith.extui %2 : i1 to i32
    %c0_i32_0 = arith.constant 0 : i32
    %4 = arith.cmpi ne, %3, %c0_i32_0 : i32
    scf.if %4 {
      %cst_31 = arith.constant 0.000000e+00 : f32
      %65 = vector.broadcast %cst_31 : f32 to vector<1x1xf32>
      %c0_32 = arith.constant 0 : index
      %c0_33 = arith.constant 0 : index
      %66 = vector.load %arg11[%c0_32, %c0_33] : memref<1x1xf32, #tpu.memory_space<vmem>>, vector<1x1xf32>
      tpu.vector_store %arg11[%c0_32, %c0_33], %65 {strides = array<i32>} : memref<1x1xf32, #tpu.memory_space<vmem>>, vector<1x1xf32>,
    } else {
    }
    %c0 = arith.constant 0 : index
    %c0_1 = arith.constant 0 : index
    %5 = vector.load %arg2[%c0, %c0_1] : memref<8x32xf32, #tpu.memory_space<vmem>>, vector<8x32xf32>
    %c0_2 = arith.constant 0 : index
    %c0_3 = arith.constant 0 : index
    %6 = vector.load %arg3[%c0_2, %c0_3] : memref<8x16xf32, #tpu.memory_space<vmem>>, vector<8x16xf32>
    %c0_4 = arith.constant 0 : index
    %c0_5 = arith.constant 0 : index
    %7 = vector.load %arg6[%c0_4, %c0_5] : memref<32x32xf32, #tpu.memory_space<vmem>>, vector<32x32xf32>
    %cst = arith.constant dense<0.000000e+00> : vector<8x32xf32>
    %8 = tpu.matmul %5, %7, %cst {dimension_numbers = #tpu.dot_dimension_numbers<[1], [0], [0], [1], [0, 0, 1, 1], [], []>} : vector<8x32xf32>, vector<32x32xf32>, vector<8x32xf32> -> vector<8x32xf32>
    %c0_6 = arith.constant 0 : index
    %c0_7 = arith.constant 0 : index
    %9 = vector.load %arg7[%c0_6, %c0_7] : memref<1x32xf32, #tpu.memory_space<vmem>>, vector<1x32xf32>
    %10 = vector.broadcast %9 : vector<1x32xf32> to vector<8x32xf32>
    %11 = arith.addf %8, %10 : vector<8x32xf32>
    %cst_8 = arith.constant 0.000000e+00 : f32
    %12 = vector.broadcast %cst_8 : f32 to vector<8x32xf32>
    %13 = arith.maximumf %11, %12 : vector<8x32xf32>
    %c0_9 = arith.constant 0 : index
    %c0_10 = arith.constant 0 : index
    %14 = vector.load %arg8[%c0_9, %c0_10] : memref<32x32xf32, #tpu.memory_space<vmem>>, vector<32x32xf32>
    %cst_11 = arith.constant dense<0.000000e+00> : vector<8x32xf32>
    %15 = tpu.matmul %13, %14, %cst_11 {dimension_numbers = #tpu.dot_dimension_numbers<[1], [0], [0], [1], [0, 0, 1, 1], [], []>} : vector<8x32xf32>, vector<32x32xf32>, vector<8x32xf32> -> vector<8x32xf32>
    %c0_12 = arith.constant 0 : index
    %c0_13 = arith.constant 0 : index
    %16 = vector.load %arg9[%c0_12, %c0_13] : memref<1x32xf32, #tpu.memory_space<vmem>>, vector<1x32xf32>
    %17 = vector.broadcast %16 : vector<1x32xf32> to vector<8x32xf32>
    %18 = arith.addf %15, %17 : vector<8x32xf32>
    %19 = vector.extract_strided_slice %18 {offsets = [0, 0], sizes = [8, 16], strides = [1, 1]} : vector<8x32xf32> to vector<8x16xf32>
    %20 = vector.extract_strided_slice %18 {offsets = [0, 16], sizes = [8, 16], strides = [1, 1]} : vector<8x32xf32> to vector<8x16xf32>
    %21 = math.tanh %20 : vector<8x16xf32>
    %cst_14 = arith.constant 0.000000e+00 : f32
    %22 = vector.broadcast %cst_14 : f32 to vector<8x16xf32>
    %23 = arith.subf %22, %21 : vector<8x16xf32>
    %24 = math.exp %23 : vector<8x16xf32>
    %25 = arith.subf %19, %6 : vector<8x16xf32>
    %26 = arith.mulf %25, %25 : vector<8x16xf32>
    %c0_15 = arith.constant 0 : index
    %c0_16 = arith.constant 0 : index
    %27 = vector.load %arg5[%c0_15, %c0_16] : memref<1x16xf32, #tpu.memory_space<vmem>>, vector<1x16xf32>
    %cst_17 = arith.constant 2.000000e+00 : f32
    %28 = vector.broadcast %cst_17 : f32 to vector<8x16xf32>
    %29 = arith.mulf %28, %19 : vector<8x16xf32>
    %c0_18 = arith.constant 0 : index
    %c0_19 = arith.constant 0 : index
    %30 = vector.load %arg4[%c0_18, %c0_19] : memref<1x16xf32, #tpu.memory_space<vmem>>, vector<1x16xf32>
    %31 = vector.broadcast %30 : vector<1x16xf32> to vector<8x16xf32>
    %32 = arith.mulf %29, %31 : vector<8x16xf32>
    %33 = vector.broadcast %27 : vector<1x16xf32> to vector<8x16xf32>
    %34 = arith.subf %33, %32 : vector<8x16xf32>
    %cst_20 = arith.constant 8.000000e+00 : f32
    %35 = vector.broadcast %cst_20 : f32 to vector<8x16xf32>
    %36 = arith.mulf %35, %19 : vector<8x16xf32>
    %37 = arith.mulf %36, %19 : vector<8x16xf32>
    %38 = arith.addf %34, %37 : vector<8x16xf32>
    %39 = arith.subf %38, %26 : vector<8x16xf32>
    %cst_21 = arith.constant 0.142857149 : f32
    %40 = vector.broadcast %cst_21 : f32 to vector<8x16xf32>
    %41 = arith.mulf %39, %40 : vector<8x16xf32>
    %42 = arith.subf %41, %26 : vector<8x16xf32>
    %43 = arith.mulf %24, %42 : vector<8x16xf32>
    %c8_i32 = arith.constant 8 : i32
    %44 = arith.muli %1, %c8_i32 : i32
    %45 = tpu.iota {dimensions = array<i32: 0>} : vector<8x1xi32>
    %46 = vector.broadcast %44 : i32 to vector<8x1xi32>
    %47 = arith.addi %46, %45 : vector<8x1xi32>
    %c8_i32_22 = arith.constant 8 : i32
    %48 = vector.broadcast %c8_i32_22 : i32 to vector<8x1xi32>
    %49 = arith.cmpi slt, %47, %48 : vector<8x1xi32>
    %cst_23 = arith.constant 0.000000e+00 : f32
    %50 = vector.shape_cast %49 : vector<8x1xi1> to vector<8x1xi1>
    %51 = vector.broadcast %50 : vector<8x1xi1> to vector<8x16xi1>
    %52 = vector.broadcast %cst_23 : f32 to vector<8x16xf32>
    %53 = arith.select %51, %43, %52 : vector<8x16xi1>, vector<8x16xf32>
    %c0_24 = arith.constant 0 : index
    %c0_25 = arith.constant 0 : index
    %54 = vector.load %arg11[%c0_24, %c0_25] : memref<1x1xf32, #tpu.memory_space<vmem>>, vector<1x1xf32>
    %55 = vector.shape_cast %53 : vector<8x16xf32> to vector<1x8x16xf32>
    %cst_26 = arith.constant dense<0.000000e+00> : vector<1xf32>
    %56 = vector.multi_reduction <add>, %55, %cst_26 [1, 2] : vector<1x8x16xf32> to vector<1xf32>
    %57 = vector.shape_cast %56 : vector<1xf32> to vector<1x1x1xf32>
    %58 = vector.extract %57[0, 0, 0] : f32 from vector<1x1x1xf32>
    %59 = vector.broadcast %58 : f32 to vector<1x1xf32>
    %60 = arith.addf %54, %59 : vector<1x1xf32>
    %c0_27 = arith.constant 0 : index
    %c0_28 = arith.constant 0 : index
    %61 = vector.load %arg11[%c0_27, %c0_28] : memref<1x1xf32, #tpu.memory_space<vmem>>, vector<1x1xf32>
    tpu.vector_store %arg11[%c0_27, %c0_28], %60 {strides = array<i32>} : memref<1x1xf32, #tpu.memory_space<vmem>>, vector<1x1xf32>,
    %c0_i32_29 = arith.constant 0 : i32
    %62 = arith.cmpi eq, %arg1, %c0_i32_29 : i32
    %63 = arith.extui %62 : i1 to i32
    %c0_i32_30 = arith.constant 0 : i32
    %64 = arith.cmpi ne, %63, %c0_i32_30 : i32
    scf.if %64 {
      %c0_31 = arith.constant 0 : index
      %c0_32 = arith.constant 0 : index
      %65 = vector.load %arg11[%c0_31, %c0_32] : memref<1x1xf32, #tpu.memory_space<vmem>>, vector<1x1xf32>
      %66 = vector.shape_cast %65 : vector<1x1xf32> to vector<1x1xf32>
      %67 = vector.broadcast %66 : vector<1x1xf32> to vector<8x128xf32>
      %c0_33 = arith.constant 0 : index
      %c0_34 = arith.constant 0 : index
      %68 = vector.load %arg10[%c0_33, %c0_34] : memref<8x128xf32, #tpu.memory_space<vmem>>, vector<8x128xf32>
      tpu.vector_store %arg10[%c0_33, %c0_34], %67 {strides = array<i32>} : memref<8x128xf32, #tpu.memory_space<vmem>>, vector<8x128xf32>,
    } else {
    }
    return
  }
  func.func @transform_0(%arg0: i32, %arg1: i32) -> (i32, i32) {
    %c1_i32 = arith.constant 1 : i32
    %0 = arith.muli %arg0, %c1_i32 : i32
    %1 = arith.addi %0, %arg1 : i32
    %c0_i32 = arith.constant 0 : i32
    %c0_i32_0 = arith.constant 0 : i32
    return %1, %c0_i32 : i32, i32
  }
  func.func @transform_1(%arg0: i32, %arg1: i32) -> (i32, i32) {
    %c1_i32 = arith.constant 1 : i32
    %0 = arith.muli %arg0, %c1_i32 : i32
    %1 = arith.addi %0, %arg1 : i32
    %c0_i32 = arith.constant 0 : i32
    %c0_i32_0 = arith.constant 0 : i32
    return %1, %c0_i32 : i32, i32
  }
  func.func @transform_2(%arg0: i32, %arg1: i32) -> (i32, i32) {
    %c0_i32 = arith.constant 0 : i32
    %c0_i32_0 = arith.constant 0 : i32
    %c0_i32_1 = arith.constant 0 : i32
    return %c0_i32, %c0_i32_0 : i32, i32
  }
  func.func @transform_3(%arg0: i32, %arg1: i32) -> (i32, i32) {
    %c0_i32 = arith.constant 0 : i32
    %c0_i32_0 = arith.constant 0 : i32
    %c0_i32_1 = arith.constant 0 : i32
    return %c0_i32, %c0_i32_0 : i32, i32
  }
  func.func @transform_4(%arg0: i32, %arg1: i32) -> (i32, i32) {
    %c0_i32 = arith.constant 0 : i32
    %c0_i32_0 = arith.constant 0 : i32
    %c0_i32_1 = arith.constant 0 : i32
    return %c0_i32, %c0_i32_0 : i32, i32
  }
  func.func @transform_5(%arg0: i32, %arg1: i32) -> (i32, i32) {
    %c0_i32 = arith.constant 0 : i32
    %c0_i32_0 = arith.constant 0 : i32
    %c0_i32_1 = arith.constant 0 : i32
    return %c0_i32, %c0_i32_0 : i32, i32
  }
  func.func @transform_6(%arg0: i32, %arg1: i32) -> (i32, i32) {
    %c0_i32 = arith.constant 0 : i32
    %c0_i32_0 = arith.constant 0 : i32
    %c0_i32_1 = arith.constant 0 : i32
    return %c0_i32, %c0_i32_0 : i32, i32
  }
  func.func @transform_7(%arg0: i32, %arg1: i32) -> (i32, i32) {
    %c0_i32 = arith.constant 0 : i32
    %c0_i32_0 = arith.constant 0 : i32
    %c0_i32_1 = arith.constant 0 : i32
    return %c0_i32, %c0_i32_0 : i32, i32
  }
  func.func @transform_8(%arg0: i32, %arg1: i32) -> (i32, i32) {
    %c0_i32 = arith.constant 0 : i32
    %c0_i32_0 = arith.constant 0 : i32
    return %c0_i32, %arg0 : i32, i32
  }
}

</mosaic_0001>

<llo_original>
// kernel: tpu_custom_call.1
$region0: #{tpu_custom_call.1}
  #allocation0 [shape = 'u32[]', space=smem, size = 0x4, offset = 0x4, fixed_abs, tag = 'smem constant byte address 0x4 - core index']
  #allocation1 [shape = 'u32[144,128]{1,0:T(1,128)}', space=vmem, size = 0x12000, scoped, tag = 'internal scratch']
  #allocation2 [shape = 'f32[1,1]{1,0:T(1,128)}', space=vmem, size = 0x200, scoped, tag = 'scratch operand']
  %s0 = inlined_call_operand.hbm [shape: f32[8,32], index: 0, kind: input, shape index: {}]
  %s1 = inlined_call_operand.hbm [shape: f32[8,16], index: 1, kind: input, shape index: {}]
  %s2 = inlined_call_operand.vmem [shape: f32[1,16], index: 2, kind: input, shape index: {}]
  %s3 = inlined_call_operand.vmem [shape: f32[1,16], index: 3, kind: input, shape index: {}]
  %s4 = inlined_call_operand.hbm [shape: f32[32,32], index: 4, kind: input, shape index: {}]
  %s5 = inlined_call_operand.vmem [shape: f32[1,32], index: 5, kind: input, shape index: {}]
  %s6 = inlined_call_operand.hbm [shape: f32[32,32], index: 6, kind: input, shape index: {}]
  %s7 = inlined_call_operand.vmem [shape: f32[1,32], index: 7, kind: input, shape index: {}]
  %s8 = inlined_call_operand.hbm [shape: f32[8,128], index: 8, kind: output, shape index: {}]
  %s9 = sld [smem:[#allocation0]]
  $region66: #{tpu_custom_call.1} parent=0
    _
  %s11 = ssub.s32 1, %s9
  %s12 = scalar_select 0, %s11, %s9
  $region1: #{tpu_custom_call.1} parent=0
    #allocation3 [shape = 'u8[4096]{0}', space=vmem, size = 0x1000, scoped, tag = 'input window, operand 0, single buffered']
    #allocation4 [shape = 's32[1]{0}', space=sflag, size = 0x4, scoped, tag = 'scoped memory for tpu_custom_call.1']
    #allocation5 [shape = 's32[1]{0}', space=sflag, size = 0x4, scoped, tag = 'scoped memory for tpu_custom_call.1']
    #allocation6 [shape = 'u8[4096]{0}', space=vmem, size = 0x1000, scoped, tag = 'input window, operand 1, single buffered']
    #allocation7 [shape = 's32[1]{0}', space=sflag, size = 0x4, scoped, tag = 'scoped memory for tpu_custom_call.1']
    #allocation8 [shape = 'u8[16384]{0}', space=vmem, size = 0x4000, scoped, tag = 'input window, operand 4, single buffered']
    #allocation9 [shape = 'u8[16384]{0}', space=vmem, size = 0x4000, scoped, tag = 'input window, operand 6, single buffered']
    #allocation10 [shape = 's32[1]{0}', space=sflag, size = 0x4, scoped, tag = 'scoped memory for tpu_custom_call.1']
    #allocation11 [shape = 'u8[4096]{0}', space=vmem, size = 0x1000, scoped, tag = 'output window, operand 0, single buffered']
    %13 = vsyncpa [#allocation4], 0
    %14 = vsyncpa [#allocation7], 0
    %15 = vsyncpa [#allocation10], 0
    %16 = vsyncpa [#allocation5], 0
    // Predicated region
    $region2: #{tpu_custom_call.1} parent=1 // pred_check
      _
    $region3: #{tpu_custom_call.1} parent=1 // pred_check_branch
      %18 = sbr.rel (0) target = $region5
    $region4: #{tpu_custom_call.1} parent=1 // pred_region
      %s19 = sadd.s32 0, 0
      %s21 = ssub.s32 128, 128
      %22 = vsyncadd [#allocation4], %s21
      %s23 = smul.addr %s19, 128
      %s24 = scalar_lea.hbm %s0, %s23
      %s26 = sshll.u32 [#allocation3], 4
      %s27 = int_to_ptr.vmem [resolvable:$true] %s26
      %29 = dma.hbm_to_vmem [thread:$0]  %s24, 128, %s27, [#allocation4]
    $region5: #{tpu_custom_call.1} parent=1 // pred_fallthru
      _
    // Predicated region
    $region6: #{tpu_custom_call.1} parent=1 // pred_check
      _
    $region7: #{tpu_custom_call.1} parent=1 // pred_check_branch
      %31 = sbr.rel (0) target = $region9
    $region8: #{tpu_custom_call.1} parent=1 // pred_region
      %s32 = sadd.s32 0, 0
      %s34 = ssub.s32 128, 128
      %35 = vsyncadd [#allocation7], %s34
      %s36 = smul.addr %s32, 128
      %s37 = scalar_lea.hbm %s1, %s36
      %s39 = sshll.u32 [#allocation6], 4
      %s40 = int_to_ptr.vmem [resolvable:$true] %s39
      %42 = dma.hbm_to_vmem [thread:$0]  %s37, 128, %s40, [#allocation7]
    $region9: #{tpu_custom_call.1} parent=1 // pred_fallthru
      _
    // Predicated region
    $region10: #{tpu_custom_call.1} parent=1 // pred_check
      _
    $region11: #{tpu_custom_call.1} parent=1 // pred_check_branch
      %44 = sbr.rel (0) target = $region13
    $region12: #{tpu_custom_call.1} parent=1 // pred_region
      _
    $region13: #{tpu_custom_call.1} parent=1 // pred_fallthru
      _
    // Predicated region
    $region14: #{tpu_custom_call.1} parent=1 // pred_check
      _
    $region15: #{tpu_custom_call.1} parent=1 // pred_check_branch
      %46 = sbr.rel (0) target = $region17
    $region16: #{tpu_custom_call.1} parent=1 // pred_region
      _
    $region17: #{tpu_custom_call.1} parent=1 // pred_fallthru
      _
    // Predicated region
    $region18: #{tpu_custom_call.1} parent=1 // pred_check
      _
    $region19: #{tpu_custom_call.1} parent=1 // pred_check_branch
      %48 = sbr.rel (0) target = $region21
    $region20: #{tpu_custom_call.1} parent=1 // pred_region
      %s50 = ssub.s32 512, 512
      %51 = vsyncadd [#allocation7], %s50
      %s52 = sshll.u32 [#allocation8], 4
      %s53 = int_to_ptr.vmem [resolvable:$true] %s52
      %58 = dma.hbm_to_vmem [thread:$0]  %s4, 512, %s53, [#allocation7], 128, 128, 8
    $region21: #{tpu_custom_call.1} parent=1 // pred_fallthru
      _
    // Predicated region
    $region22: #{tpu_custom_call.1} parent=1 // pred_check
      _
    $region23: #{tpu_custom_call.1} parent=1 // pred_check_branch
      %60 = sbr.rel (0) target = $region25
    $region24: #{tpu_custom_call.1} parent=1 // pred_region
      _
    $region25: #{tpu_custom_call.1} parent=1 // pred_fallthru
      _
    // Predicated region
    $region26: #{tpu_custom_call.1} parent=1 // pred_check
      _
    $region27: #{tpu_custom_call.1} parent=1 // pred_check_branch
      %62 = sbr.rel (0) target = $region29
    $region28: #{tpu_custom_call.1} parent=1 // pred_region
      %s64 = ssub.s32 512, 512
      %65 = vsyncadd [#allocation10], %s64
      %s66 = sshll.u32 [#allocation9], 4
      %s67 = int_to_ptr.vmem [resolvable:$true] %s66
      %72 = dma.hbm_to_vmem [thread:$0]  %s6, 512, %s67, [#allocation10], 128, 128, 8
    $region29: #{tpu_custom_call.1} parent=1 // pred_fallthru
      _
    // Predicated region
    $region30: #{tpu_custom_call.1} parent=1 // pred_check
      _
    $region31: #{tpu_custom_call.1} parent=1 // pred_check_branch
      %74 = sbr.rel (0) target = $region33
    $region32: #{tpu_custom_call.1} parent=1 // pred_region
      _
    $region33: #{tpu_custom_call.1} parent=1 // pred_fallthru
      _
    // Predicated region
    $region34: #{tpu_custom_call.1} parent=1 // pred_check
      _
    $region35: #{tpu_custom_call.1} parent=1 // pred_check_branch
      %76 = sbr.rel (0) target = $region37
    $region36: #{tpu_custom_call.1} parent=1 // pred_region
      %77 = dma.done [#allocation4], 128
    $region37: #{tpu_custom_call.1} parent=1 // pred_fallthru
      _
    // Predicated region
    $region38: #{tpu_custom_call.1} parent=1 // pred_check
      _
    $region39: #{tpu_custom_call.1} parent=1 // pred_check_branch
      %79 = sbr.rel (0) target = $region41
    $region40: #{tpu_custom_call.1} parent=1 // pred_region
      %80 = dma.done [#allocation7], 128
    $region41: #{tpu_custom_call.1} parent=1 // pred_fallthru
      _
    // Predicated region
    $region42: #{tpu_custom_call.1} parent=1 // pred_check
      _
    $region43: #{tpu_custom_call.1} parent=1 // pred_check_branch
      %82 = sbr.rel (0) target = $region45
    $region44: #{tpu_custom_call.1} parent=1 // pred_region
      %83 = dma.done [#allocation7], 512
    $region45: #{tpu_custom_call.1} parent=1 // pred_fallthru
      _
    // Predicated region
    $region46: #{tpu_custom_call.1} parent=1 // pred_check
      _
    $region47: #{tpu_custom_call.1} parent=1 // pred_check_branch
      %85 = sbr.rel (0) target = $region49
    $region48: #{tpu_custom_call.1} parent=1 // pred_region
      %86 = dma.done [#allocation10], 512
    $region49: #{tpu_custom_call.1} parent=1 // pred_fallthru
      _
    %s87 = sadd.s32 0, 0
    %s88 = sadd.s32 0, 0
    %s89 = sadd.s32 0, 0
    %p90 = scmp.eq.s32.totalorder 0, 0
    // Predicated region
    $region50: #{tpu_custom_call.1} parent=1 // pred_check
      %p91 = pneg %p90
    $region51: #{tpu_custom_call.1} parent=1 // pred_check_branch
      %93 = sbr.rel (%p91) target = $region53
    $region52: #{tpu_custom_call.1} parent=1 // pred_region
      %vm94 = vcmask 0
      %95 = vst.msk [vmem:[#allocation2] sm:$0x1] %vm94, 0.0
    $region53: #{tpu_custom_call.1} parent=1 // pred_fallthru
      _
    %v96 = vld [vmem:[#allocation3] sm:$0xff]
    %v97 = vld [vmem:[#allocation6] sm:$0xff]
    %v98 = vld [vmem:[#allocation8] sm:$0xff]
    %v99 = vld [vmem:[#allocation8 + $0x8] sm:$0xff]
    %v100 = vld [vmem:[#allocation8 + $0x10] sm:$0xff]
    %v101 = vld [vmem:[#allocation8 + $0x18] sm:$0xff]
    %v102 = vld [vmem:[%s5] sm:$0x1]
    %v104 = vlaneseq
    %v105 = vshrl.u32 %v104, 7
    %v106 = vsub.s32 0, %v105
    %v107 = vrot.slane %v102, %v106
    %vm109 = vcmask 261120
    %v111 = vsel %vm109, %v96, 0
    %113 = vmatprep.subr.mxu0 0.0
    %114 = vmatpush1.msra.mxu0 %v98
    %115 = vmatprep.subr.mxu0 0.0
    %116 = vmatpush1.msra.mxu0 %v99
    %117 = vmatprep.subr.mxu0 0.0
    %118 = vmatpush1.msra.mxu0 %v100
    %119 = vmatprep.subr.mxu0 0.0
    %120 = vmatpush1.msra.mxu0 %v101
    %121 = vmatprep.subr.mxu0 0.0
    %122 = vmatpush1.msra.mxu0 0.0
    %123 = vmatprep.subr.mxu0 0.0
    %124 = vmatpush1.msra.mxu0 0.0
    %125 = vmatprep.subr.mxu0 0.0
    %126 = vmatpush1.msra.mxu0 0.0
    %127 = vmatprep.subr.mxu0 0.0
    %128 = vmatpush1.msra.mxu0 0.0
    %129 = vmatprep.subr.mxu0 0.0
    %130 = vmatpush1.msra.mxu0 0.0
    %131 = vmatprep.subr.mxu0 0.0
    %132 = vmatpush1.msra.mxu0 0.0
    %133 = vmatprep.subr.mxu0 0.0
    %134 = vmatpush1.msra.mxu0 0.0
    %135 = vmatprep.subr.mxu0 0.0
    %136 = vmatpush1.msra.mxu0 0.0
    %137 = vmatprep.subr.mxu0 0.0
    %138 = vmatpush1.msra.mxu0 0.0
    %139 = vmatprep.subr.mxu0 0.0
    %140 = vmatpush1.msra.mxu0 0.0
    %141 = vmatprep.subr.mxu0 0.0
    %142 = vmatpush1.msra.mxu0 0.0
    %143 = vmatprep.subr.mxu0 0.0
    %144 = vmatpush1.msra.mxu0 0.0
    %145 = vmatprep.subr.mxu0 0.0
    %146 = vmatpush1.msra.mxu0 0.0
    %147 = vmatprep.subr.mxu0 0.0
    %148 = vmatpush1.msra.mxu0 0.0
    %149 = vmatprep.subr.mxu0 0.0
    %150 = vmatpush1.msra.mxu0 0.0
    %151 = vmatprep.subr.mxu0 0.0
    %152 = vmatpush1.msra.mxu0 0.0
    %153 = vmatprep.subr.mxu0 0.0
    %154 = vmatpush1.msra.mxu0 0.0
    %155 = vmatprep.subr.mxu0 0.0
    %156 = vmatpush1.msra.mxu0 0.0
    %157 = vmatprep.subr.mxu0 0.0
    %158 = vmatpush1.msra.mxu0 0.0
    %159 = vmatprep.subr.mxu0 0.0
    %160 = vmatpush1.msra.mxu0 0.0
    %161 = vmatprep.subr.mxu0 0.0
    %162 = vmatpush1.msra.mxu0 0.0
    %163 = vmatprep.subr.mxu0 0.0
    %164 = vmatpush1.msra.mxu0 0.0
    %165 = vmatprep.subr.mxu0 0.0
    %166 = vmatpush1.msra.mxu0 0.0
    %167 = vmatprep.subr.mxu0 0.0
    %168 = vmatpush1.msra.mxu0 0.0
    %169 = vmatprep.subr.mxu0 0.0
    %170 = vmatpush1.msra.mxu0 0.0
    %171 = vmatprep.subr.mxu0 0.0
    %172 = vmatpush1.msra.mxu0 0.0
    %173 = vmatprep.subr.mxu0 0.0
    %174 = vmatpush1.msra.mxu0 0.0
    %175 = vmatprep.subr.mxu0 0.0
    %176 = vmatpush1.msra.mxu0 0.0
    %177 = vmatprep.mubr.f32.mxu0 0.0
    %178 = vmatmul.mubr.f32.gmra.mrb[0].mxu0 %v111
    %v179 = vpop.f32.mrb[0].mxu0
    %v180 = vadd.f32 %v107, %v179
    %v181 = vpop.f32.mrb[0].mxu0
    %182 = vdwg.mxu0
    %v183 = vmax.f32 %v180, 0.0
    %v184 = vld [vmem:[#allocation9] sm:$0xff]
    %v185 = vld [vmem:[#allocation9 + $0x8] sm:$0xff]
    %v186 = vld [vmem:[#allocation9 + $0x10] sm:$0xff]
    %v187 = vld [vmem:[#allocation9 + $0x18] sm:$0xff]
    %v188 = vld [vmem:[%s7] sm:$0x1]
    %v190 = vlaneseq
    %v191 = vshrl.u32 %v190, 7
    %v192 = vsub.s32 0, %v191
    %v193 = vrot.slane %v188, %v192
    %v196 = vsel %vm109, %v183, 0
    %198 = vmatprep.subr.mxu0 0.0
    %199 = vmatpush1.msra.mxu0 %v184
    %200 = vmatprep.subr.mxu0 0.0
    %201 = vmatpush1.msra.mxu0 %v185
    %202 = vmatprep.subr.mxu0 0.0
    %203 = vmatpush1.msra.mxu0 %v186
    %204 = vmatprep.subr.mxu0 0.0
    %205 = vmatpush1.msra.mxu0 %v187
    %206 = vmatprep.subr.mxu0 0.0
    %207 = vmatpush1.msra.mxu0 0.0
    %208 = vmatprep.subr.mxu0 0.0
    %209 = vmatpush1.msra.mxu0 0.0
    %210 = vmatprep.subr.mxu0 0.0
    %211 = vmatpush1.msra.mxu0 0.0
    %212 = vmatprep.subr.mxu0 0.0
    %213 = vmatpush1.msra.mxu0 0.0
    %214 = vmatprep.subr.mxu0 0.0
    %215 = vmatpush1.msra.mxu0 0.0
    %216 = vmatprep.subr.mxu0 0.0
    %217 = vmatpush1.msra.mxu0 0.0
    %218 = vmatprep.subr.mxu0 0.0
    %219 = vmatpush1.msra.mxu0 0.0
    %220 = vmatprep.subr.mxu0 0.0
    %221 = vmatpush1.msra.mxu0 0.0
    %222 = vmatprep.subr.mxu0 0.0
    %223 = vmatpush1.msra.mxu0 0.0
    %224 = vmatprep.subr.mxu0 0.0
    %225 = vmatpush1.msra.mxu0 0.0
    %226 = vmatprep.subr.mxu0 0.0
    %227 = vmatpush1.msra.mxu0 0.0
    %228 = vmatprep.subr.mxu0 0.0
    %229 = vmatpush1.msra.mxu0 0.0
    %230 = vmatprep.subr.mxu0 0.0
    %231 = vmatpush1.msra.mxu0 0.0
    %232 = vmatprep.subr.mxu0 0.0
    %233 = vmatpush1.msra.mxu0 0.0
    %234 = vmatprep.subr.mxu0 0.0
    %235 = vmatpush1.msra.mxu0 0.0
    %236 = vmatprep.subr.mxu0 0.0
    %237 = vmatpush1.msra.mxu0 0.0
    %238 = vmatprep.subr.mxu0 0.0
    %239 = vmatpush1.msra.mxu0 0.0
    %240 = vmatprep.subr.mxu0 0.0
    %241 = vmatpush1.msra.mxu0 0.0
    %242 = vmatprep.subr.mxu0 0.0
    %243 = vmatpush1.msra.mxu0 0.0
    %244 = vmatprep.subr.mxu0 0.0
    %245 = vmatpush1.msra.mxu0 0.0
    %246 = vmatprep.subr.mxu0 0.0
    %247 = vmatpush1.msra.mxu0 0.0
    %248 = vmatprep.subr.mxu0 0.0
    %249 = vmatpush1.msra.mxu0 0.0
    %250 = vmatprep.subr.mxu0 0.0
    %251 = vmatpush1.msra.mxu0 0.0
    %252 = vmatprep.subr.mxu0 0.0
    %253 = vmatpush1.msra.mxu0 0.0
    %254 = vmatprep.subr.mxu0 0.0
    %255 = vmatpush1.msra.mxu0 0.0
    %256 = vmatprep.subr.mxu0 0.0
    %257 = vmatpush1.msra.mxu0 0.0
    %258 = vmatprep.subr.mxu0 0.0
    %259 = vmatpush1.msra.mxu0 0.0
    %260 = vmatprep.subr.mxu0 0.0
    %261 = vmatpush1.msra.mxu0 0.0
    %262 = vmatprep.mubr.f32.mxu0 0.0
    %263 = vmatmul.mubr.f32.gmra.mrb[0].mxu0 %v196
    %v264 = vpop.f32.mrb[0].mxu0
    %v265 = vadd.f32 %v193, %v264
    %v266 = vpop.f32.mrb[0].mxu0
    %267 = vdwg.mxu0
    %v268 = vtanh.pop %v265
    %v269 = vsub.f32 0.0, %v268
    %v270 = vmul.f32 %v269, 1.442695
    %v271 = vpow.pop %v270
    %v272 = vsub.f32 %v265, %v97
    %v273 = vmul.f32 %v272, %v272
    %v274 = vld [vmem:[%s3] sm:$0x1]
    %v275 = vmul.f32 %v265, 2.0
    %v276 = vld [vmem:[%s2] sm:$0x1]
    %v278 = vlaneseq
    %v279 = vshrl.u32 %v278, 7
    %v280 = vsub.s32 0, %v279
    %v281 = vrot.slane %v276, %v280
    %v283 = vmul.f32 %v275, %v281
    %v285 = vlaneseq
    %v286 = vshrl.u32 %v285, 7
    %v287 = vsub.s32 0, %v286
    %v288 = vrot.slane %v274, %v287
    %v290 = vsub.f32 %v288, %v283
    %v291 = vmul.f32 %v265, 8.0
    %v292 = vmul.f32 %v291, %v265
    %v293 = vadd.f32 %v290, %v292
    %v294 = vsub.f32 %v293, %v273
    %v295 = vmul.f32 %v294, 0.14285715
    %v296 = vsub.f32 %v295, %v273
    %298 = vrot.lane.b32.xlu0 %v296, 16
    %v299 = vpop.permute.xlu0 %298
    %v301 = vmul.f32 %v271, %v299
    %s302 = smul.u32 %s89, 8
    %v303 = vlaneseq
    %v304 = vshrl.u32 %v303, 7
    %v305 = vstv %s302
    %v306 = vadd.s32 %v305, %v304
    %vm307 = vcmp.lt.s32.totalorder %v306, 8
    %v308 = vsel %vm307, 1, 0
    %vm309 = vcmp.eq.s32.totalorder %v308, 1
    %v310 = vsel %vm309, %v301, 0.0
    %v311 = vld [vmem:[#allocation2] sm:$0x1]
    %313 = vrot.lane.b32.xlu0 %v310, 112
    %v314 = vpop.permute.xlu0 %313
    %vm316 = vcmask 130048
    %v317 = vsel %vm316, %v314, 0.0
    %318 = vadd.xlane.f32.xlu0 %v317
    %v319 = vpop.xlane.xlu0 %318
    %v320 = vrot.slane %v319, 4
    %v321 = vadd.f32 %v319, %v320
    %v322 = vrot.slane %v321, 2
    %v323 = vadd.f32 %v321, %v322
    %v324 = vrot.slane %v323, 1
    %v325 = vadd.f32 %v323, %v324
    %s326 = vtos %v325
    %v327 = vstv %s326
    %v328 = vadd.f32 %v311, %v327
    %vm329 = vcmask 0
    %330 = vst.msk [vmem:[#allocation2] sm:$0x1] %vm329, %v328
    // Predicated region
    $region54: #{tpu_custom_call.1} parent=1 // pred_check
      %p331 = pneg %p90
    $region55: #{tpu_custom_call.1} parent=1 // pred_check_branch
      %333 = sbr.rel (%p331) target = $region57
    $region56: #{tpu_custom_call.1} parent=1 // pred_region
      %v334 = vld [vmem:[#allocation2] sm:$0x1]
      %v336 = vlaneseq
      %v337 = vshrl.u32 %v336, 7
      %v338 = vsub.s32 0, %v337
      %v339 = vrot.slane %v334, %v338
      %340 = vset.pattern.permute.xlu0 0
      %341 = vperm.xlu0 %340, %v339
      %v342 = vpop.permute.xlu0 %341
      %344 = vst [vmem:[#allocation11] sm:$0xff] %v342
    $region57: #{tpu_custom_call.1} parent=1 // pred_fallthru
      _
    // Predicated region
    $region58: #{tpu_custom_call.1} parent=1 // pred_check
      _
    $region59: #{tpu_custom_call.1} parent=1 // pred_check_branch
      %346 = sbr.rel (0) target = $region61
    $region60: #{tpu_custom_call.1} parent=1 // pred_region
      %s348 = ssub.s32 128, 128
      %349 = vsyncadd [#allocation5], %s348
      %s351 = sshll.u32 [#allocation11], 4
      %s352 = int_to_ptr.vmem [resolvable:$true] %s351
      %354 = dma.vmem_to_hbm [thread:$0]  %s352, 128, %s8, [#allocation5]
    $region61: #{tpu_custom_call.1} parent=1 // pred_fallthru
      _
    // Predicated region
    $region62: #{tpu_custom_call.1} parent=1 // pred_check
      _
    $region63: #{tpu_custom_call.1} parent=1 // pred_check_branch
      %356 = sbr.rel (0) target = $region65
    $region64: #{tpu_custom_call.1} parent=1 // pred_region
      %357 = dma.done [#allocation5], 128
    $region65: #{tpu_custom_call.1} parent=1 // pred_fallthru
      _
    %358 = vsyncpa [#allocation4], 1
    %359 = vsyncpa [#allocation7], 1
    %360 = vsyncpa [#allocation10], 1
    %361 = vsyncpa [#allocation5], 1

</llo_original>
